<compile_context>
chip_gen: v7x
topology: tpu7x:2x2x1
jax: 0.10.0
libtpu: 0.0.40
codegen_flags: <defaults>
</compile_context>

<pallas_src>
import functools

import jax
import jax.numpy as jnp
from jax.experimental import pallas as pl
from jax.experimental.pallas import tpu as pltpu


# ---------------------------------------------------------------------------
# Kernel 1: input -> gate pre-activations for BOTH directions, one big matmul.
# ---------------------------------------------------------------------------
def _gates_kernel(x_ref, w_ref, b_ref, gf_ref, gb_ref, *, hidden_size):
    """x_ref : (TM, D)  bf16 rows in time-major (t, b) order.
       w_ref : (D, 8H)  bf16 = [Wih_fwd | Wih_bwd] (pre-transposed).
       b_ref : (1, 8H)  f32  = [b_ih+b_hh fwd | b_ih+b_hh bwd].
       gf/gb : (TM, 4H) bf16 gate pre-activations per direction."""
    H = hidden_size
    g = jnp.dot(x_ref[...], w_ref[...], preferred_element_type=jnp.float32)
    g = g + b_ref[...]
    gf_ref[...] = g[:, : 4 * H].astype(gf_ref.dtype)
    gb_ref[...] = g[:, 4 * H:].astype(gb_ref.dtype)


# ---------------------------------------------------------------------------
# Kernel 2: fused bidirectional recurrence, streamed over time.
# ---------------------------------------------------------------------------
def _bilstm_kernel(len_ref, gf_ref, gb_ref, whhf_ref, whhb_ref,
                   whpf_ref, whpb_ref, wcpf_ref, wcpb_ref,
                   outf_ref, outb_ref, dech_ref, decc_ref,
                   hf_sc, cf_sc, hb_sc, cb_sc,
                   *, hidden_size, seq_len):
    H = hidden_size
    T = seq_len
    t = pl.program_id(1)           # forward time index
    tb = (T - 1) - t               # backward time index

    @pl.when(t == 0)
    def _init():
        hf_sc[...] = jnp.zeros_like(hf_sc)
        cf_sc[...] = jnp.zeros_like(cf_sc)
        hb_sc[...] = jnp.zeros_like(hb_sc)
        cb_sc[...] = jnp.zeros_like(cb_sc)

    lengths = len_ref[...]         # (TB, 1) int32

    def lstm_cell(pre_f32, h, c, whh):
        gates = pre_f32 + jnp.dot(h.astype(whh.dtype), whh,
                                  preferred_element_type=jnp.float32)
        i = jax.nn.sigmoid(gates[:, 0 * H:1 * H])
        f = jax.nn.sigmoid(gates[:, 1 * H:2 * H])
        g = jnp.tanh(gates[:, 2 * H:3 * H])
        o = jax.nn.sigmoid(gates[:, 3 * H:4 * H])
        c_new = f * c + i * g
        h_new = o * jnp.tanh(c_new)
        return h_new, c_new

    # ---- forward direction @ time t ----
    hf_new, cf_new = lstm_cell(gf_ref[0].astype(jnp.float32),
                               hf_sc[...], cf_sc[...], whhf_ref[...])
    mask_f = t < lengths                                      # (TB, 1) bool
    outf_ref[0] = jnp.where(mask_f, hf_new, 0.0).astype(outf_ref.dtype)
    hf_sc[...] = jnp.where(mask_f, hf_new, hf_sc[...])
    cf_sc[...] = jnp.where(mask_f, cf_new, cf_sc[...])

    # ---- backward direction @ time T-1-t ----
    hb_new, cb_new = lstm_cell(gb_ref[0].astype(jnp.float32),
                               hb_sc[...], cb_sc[...], whhb_ref[...])
    mask_b = tb < lengths
    outb_ref[0] = jnp.where(mask_b, hb_new, 0.0).astype(outb_ref.dtype)
    hb_sc[...] = jnp.where(mask_b, hb_new, hb_sc[...])
    cb_sc[...] = jnp.where(mask_b, cb_new, cb_sc[...])

    # ---- decoder-init projections at the last step (no concatenate) ----
    @pl.when(t == T - 1)
    def _finalize():
        bd = whpf_ref.dtype
        dech_ref[...] = (
            jnp.dot(hf_sc[...].astype(bd), whpf_ref[...], preferred_element_type=jnp.float32)
            + jnp.dot(hb_sc[...].astype(bd), whpb_ref[...], preferred_element_type=jnp.float32)
        ).astype(dech_ref.dtype)
        decc_ref[...] = (
            jnp.dot(cf_sc[...].astype(bd), wcpf_ref[...], preferred_element_type=jnp.float32)
            + jnp.dot(cb_sc[...].astype(bd), wcpb_ref[...], preferred_element_type=jnp.float32)
        ).astype(decc_ref.dtype)


# ---------------------------------------------------------------------------
# Wrapper
# ---------------------------------------------------------------------------
def _pick_row_tile(rows, target=256):
    """Row tile for the big gates matmul (>=256 rows fills the v6e/v7x MXU)."""
    if rows <= target:
        return rows
    best = None
    c = 8
    while c <= target:
        if rows % c == 0:
            best = c
        c += 8
    return best if best is not None else rows


def _pick_batch_tile(batch):
    """Shard the batch-parallel (time-serial) recurrence across TensorCores when
    the batch is big enough; tiles stay sublane-aligned (multiple of 8)."""
    if batch >= 16 and batch % 16 == 0:
        return batch // 2
    return batch


def encoder_rnn_forward(x, lengths, params):
    """x: (B, T, D) float32, lengths: (B,) int. Returns (enc_out, (dec_h, dec_c))."""
    B, T, D = x.shape
    H = params["hidden_size"]
    bf16 = jnp.bfloat16

    # ---- parameter prep (bf16 matmul operands; f32 accumulation in-kernel) ----
    w_all = jnp.concatenate([params["w_ih_f"].T, params["w_ih_b"].T],
                            axis=1).astype(bf16)                          # (D, 8H)
    b_all = jnp.concatenate([params["b_ih_f"] + params["b_hh_f"],
                             params["b_ih_b"] + params["b_hh_b"]]
                            ).reshape(1, 8 * H).astype(jnp.float32)       # (1, 8H)
    whh_f = params["w_hh_f"].T.astype(bf16)                               # (H, 4H)
    whh_b = params["w_hh_b"].T.astype(bf16)
    whp = params["w_hproj"].T                                             # (2H, H)
    wcp = params["w_cproj"].T
    whp_f, whp_b = whp[:H].astype(bf16), whp[H:].astype(bf16)             # (H, H) each
    wcp_f, wcp_b = wcp[:H].astype(bf16), wcp[H:].astype(bf16)

    lengths2d = lengths.astype(jnp.int32).reshape(B, 1)

    # Time-major rows so the recurrence streams contiguous (1, B, 4H) gate tiles.
    x_rows = jnp.transpose(x, (1, 0, 2)).astype(bf16).reshape(T * B, D)

    # ---- kernel 1: all input->gate matmuls as one pipelined pass ----
    rows = T * B
    TM = _pick_row_tile(rows)
    gates_f2d, gates_b2d = pl.pallas_call(
        functools.partial(_gates_kernel, hidden_size=H),
        out_shape=(jax.ShapeDtypeStruct((rows, 4 * H), bf16),
                   jax.ShapeDtypeStruct((rows, 4 * H), bf16)),
        grid=(rows // TM,),
        in_specs=[pl.BlockSpec((TM, D), lambda i: (i, 0)),
                  pl.BlockSpec((D, 8 * H), lambda i: (0, 0)),
                  pl.BlockSpec((1, 8 * H), lambda i: (0, 0))],
        out_specs=(pl.BlockSpec((TM, 4 * H), lambda i: (i, 0)),
                   pl.BlockSpec((TM, 4 * H), lambda i: (i, 0))),
        compiler_params=pltpu.CompilerParams(
            dimension_semantics=("parallel",),
            vmem_limit_bytes=32 * 1024 * 1024),
    )(x_rows, w_all, b_all)

    gates_f = gates_f2d.reshape(T, B, 4 * H)   # leading-dim split: layout-preserving
    gates_b = gates_b2d.reshape(T, B, 4 * H)

    # ---- kernel 2: streamed fused bidirectional recurrence ----
    TB = _pick_batch_tile(B)
    nb = B // TB
    kernel = functools.partial(_bilstm_kernel, hidden_size=H, seq_len=T)
    out_f, out_b, dec_h, dec_c = pl.pallas_call(
        kernel,
        out_shape=(jax.ShapeDtypeStruct((T, B, H), jnp.float32),
                   jax.ShapeDtypeStruct((T, B, H), jnp.float32),
                   jax.ShapeDtypeStruct((B, H), jnp.float32),
                   jax.ShapeDtypeStruct((B, H), jnp.float32)),
        grid=(nb, T),
        in_specs=[
            pl.BlockSpec((TB, 1), lambda b, t: (b, 0)),                    # lengths
            pl.BlockSpec((1, TB, 4 * H), lambda b, t: (t, b, 0)),          # fwd gates
            pl.BlockSpec((1, TB, 4 * H), lambda b, t: (T - 1 - t, b, 0)),  # bwd gates
            pl.BlockSpec((H, 4 * H), lambda b, t: (0, 0)),                 # Whh fwd
            pl.BlockSpec((H, 4 * H), lambda b, t: (0, 0)),                 # Whh bwd
            pl.BlockSpec((H, H), lambda b, t: (0, 0)),                     # h-proj fwd half
            pl.BlockSpec((H, H), lambda b, t: (0, 0)),                     # h-proj bwd half
            pl.BlockSpec((H, H), lambda b, t: (0, 0)),                     # c-proj fwd half
            pl.BlockSpec((H, H), lambda b, t: (0, 0)),                     # c-proj bwd half
        ],
        out_specs=(
            pl.BlockSpec((1, TB, H), lambda b, t: (t, b, 0)),              # fwd hiddens
            pl.BlockSpec((1, TB, H), lambda b, t: (T - 1 - t, b, 0)),      # bwd hiddens
            pl.BlockSpec((TB, H), lambda b, t: (b, 0)),                    # dec init h
            pl.BlockSpec((TB, H), lambda b, t: (b, 0)),                    # dec init c
        ),
        scratch_shapes=[pltpu.VMEM((TB, H), jnp.float32),
                        pltpu.VMEM((TB, H), jnp.float32),
                        pltpu.VMEM((TB, H), jnp.float32),
                        pltpu.VMEM((TB, H), jnp.float32)],
        compiler_params=pltpu.CompilerParams(
            dimension_semantics=("parallel", "arbitrary"),
            vmem_limit_bytes=32 * 1024 * 1024),
    )(lengths2d, gates_f, gates_b, whh_f, whh_b, whp_f, whp_b, wcp_f, wcp_b)

    # Back to batch_first, concat [forward, backward] on the feature axis.
    # TODO(synk): a single fused (T,B,2H) in-kernel output would need both the t and
    # T-1-t slabs in the same grid step; the concat+transpose is left to XLA fusion.
    enc_out = jnp.transpose(jnp.concatenate([out_f, out_b], axis=-1), (1, 0, 2))
    dec_init = (dec_h[None, :, :], dec_c[None, :, :])   # (num_layers=1, B, H)
    return enc_out, dec_init


def make_params(key, input_size, hidden_size):
    """Deterministic parameter init mirroring nn.LSTM / nn.Linear shapes."""
    H, D = hidden_size, input_size
    k = 1.0 / jnp.sqrt(jnp.float32(H))
    keys = jax.random.split(key, 10)
    u = lambda kk, shape: jax.random.uniform(kk, shape, jnp.float32, -k, k)
    return {
        "hidden_size": H,
        # forward direction
        "w_ih_f": u(keys[0], (4 * H, D)),
        "w_hh_f": u(keys[1], (4 * H, H)),
        "b_ih_f": u(keys[2], (4 * H,)),
        "b_hh_f": u(keys[3], (4 * H,)),
        # backward direction
        "w_ih_b": u(keys[4], (4 * H, D)),
        "w_hh_b": u(keys[5], (4 * H, H)),
        "b_ih_b": u(keys[6], (4 * H,)),
        "b_hh_b": u(keys[7], (4 * H,)),
        # bias-free projections (out_features=H, in_features=2H)
        "w_hproj": u(keys[8], (H, 2 * H)),
        "w_cproj": u(keys[9], (H, 2 * H)),
    }


if __name__ == "__main__":
    B, T, D, H = 2, 8, 16, 32
    key = jax.random.PRNGKey(0)
    k_x, k_p = jax.random.split(key)

    x = jax.random.normal(k_x, (B, T, D), jnp.float32)
    lengths = jnp.array([8, 5], jnp.int32)      # second sequence is padded past t=5
    params = make_params(k_p, D, H)

    enc_out, (dec_h, dec_c) = encoder_rnn_forward(x, lengths, params)
    jax.block_until_ready((enc_out, dec_h, dec_c))

    assert enc_out.shape == (B, T, 2 * H)
    assert dec_h.shape == (1, B, H) and dec_c.shape == (1, B, H)
    assert bool(jnp.all(jnp.isfinite(enc_out)))
    assert bool(jnp.all(jnp.isfinite(dec_h))) and bool(jnp.all(jnp.isfinite(dec_c)))
    # padded positions of sequence 1 (t >= 5) must be exactly zero
    assert bool(jnp.all(enc_out[1, 5:, :] == 0.0))

    print("KERNEL_OK")
</pallas_src>

<mosaic_0001>
module attributes {stable_mosaic.version = 11 : i64} {
  func.func @_gates_kernel(%arg0: i32, %arg1: memref<16x16xbf16, #tpu.memory_space<vmem>>, %arg2: memref<16x256xbf16, #tpu.memory_space<vmem>>, %arg3: memref<1x256xf32, #tpu.memory_space<vmem>>, %arg4: memref<16x128xbf16, #tpu.memory_space<vmem>>, %arg5: memref<16x128xbf16, #tpu.memory_space<vmem>>) attributes {dimension_semantics = [#tpu.dimension_semantics<parallel>], iteration_bounds = array<i64: 1>, scalar_prefetch = 0 : i64, scratch_operands = 0 : i64, tpu.core_type = #tpu.core_type<tc>, window_params = [{transform_indices = @transform_0, window_bounds = array<i64: 16, 16>}, {pipeline_mode = #tpu.pipeline_mode<synchronous>, transform_indices = @transform_1, window_bounds = array<i64: 16, 256>}, {pipeline_mode = #tpu.pipeline_mode<synchronous>, transform_indices = @transform_2, window_bounds = array<i64: 1, 256>}, {transform_indices = @transform_3, window_bounds = array<i64: 16, 128>}, {transform_indices = @transform_4, window_bounds = array<i64: 16, 128>}]} {
    %c0 = arith.constant 0 : index
    %c0_0 = arith.constant 0 : index
    %0 = vector.load %arg1[%c0, %c0_0] : memref<16x16xbf16, #tpu.memory_space<vmem>>, vector<16x16xbf16>
    %c0_1 = arith.constant 0 : index
    %c0_2 = arith.constant 0 : index
    %1 = vector.load %arg2[%c0_1, %c0_2] : memref<16x256xbf16, #tpu.memory_space<vmem>>, vector<16x256xbf16>
    %cst = arith.constant dense<0.000000e+00> : vector<16x256xf32>
    %2 = tpu.matmul %0, %1, %cst {dimension_numbers = #tpu.dot_dimension_numbers<[1], [0], [0], [1], [0, 0, 1, 1], [], []>} : vector<16x16xbf16>, vector<16x256xbf16>, vector<16x256xf32> -> vector<16x256xf32>
    %c0_3 = arith.constant 0 : index
    %c0_4 = arith.constant 0 : index
    %3 = vector.load %arg3[%c0_3, %c0_4] : memref<1x256xf32, #tpu.memory_space<vmem>>, vector<1x256xf32>
    %4 = vector.broadcast %3 : vector<1x256xf32> to vector<16x256xf32>
    %5 = arith.addf %2, %4 : vector<16x256xf32>
    %6 = vector.extract_strided_slice %5 {offsets = [0, 0], sizes = [16, 128], strides = [1, 1]} : vector<16x256xf32> to vector<16x128xf32>
    %7 = arith.truncf %6 : vector<16x128xf32> to vector<16x128xbf16>
    %c0_5 = arith.constant 0 : index
    %c0_6 = arith.constant 0 : index
    %8 = vector.load %arg4[%c0_5, %c0_6] : memref<16x128xbf16, #tpu.memory_space<vmem>>, vector<16x128xbf16>
    tpu.vector_store %arg4[%c0_5, %c0_6], %7 {strides = array<i32>} : memref<16x128xbf16, #tpu.memory_space<vmem>>, vector<16x128xbf16>,
    %9 = vector.extract_strided_slice %5 {offsets = [0, 128], sizes = [16, 128], strides = [1, 1]} : vector<16x256xf32> to vector<16x128xf32>
    %10 = arith.truncf %9 : vector<16x128xf32> to vector<16x128xbf16>
    %c0_7 = arith.constant 0 : index
    %c0_8 = arith.constant 0 : index
    %11 = vector.load %arg5[%c0_7, %c0_8] : memref<16x128xbf16, #tpu.memory_space<vmem>>, vector<16x128xbf16>
    tpu.vector_store %arg5[%c0_7, %c0_8], %10 {strides = array<i32>} : memref<16x128xbf16, #tpu.memory_space<vmem>>, vector<16x128xbf16>,
    return
  }
  func.func @transform_0(%arg0: i32) -> (i32, i32) {
    %c0_i32 = arith.constant 0 : i32
    %c0_i32_0 = arith.constant 0 : i32
    return %arg0, %c0_i32 : i32, i32
  }
  func.func @transform_1(%arg0: i32) -> (i32, i32) {
    %c0_i32 = arith.constant 0 : i32
    %c0_i32_0 = arith.constant 0 : i32
    %c0_i32_1 = arith.constant 0 : i32
    return %c0_i32, %c0_i32_0 : i32, i32
  }
  func.func @transform_2(%arg0: i32) -> (i32, i32) {
    %c0_i32 = arith.constant 0 : i32
    %c0_i32_0 = arith.constant 0 : i32
    %c0_i32_1 = arith.constant 0 : i32
    return %c0_i32, %c0_i32_0 : i32, i32
  }
  func.func @transform_3(%arg0: i32) -> (i32, i32) {
    %c0_i32 = arith.constant 0 : i32
    %c0_i32_0 = arith.constant 0 : i32
    return %arg0, %c0_i32 : i32, i32
  }
  func.func @transform_4(%arg0: i32) -> (i32, i32) {
    %c0_i32 = arith.constant 0 : i32
    %c0_i32_0 = arith.constant 0 : i32
    return %arg0, %c0_i32 : i32, i32
  }
}

</mosaic_0001>

<llo_original>
// kernel: tpu_custom_call.1
$region0: #{tpu_custom_call.1}
  #allocation0 [shape = 'u32[]', space=smem, size = 0x4, offset = 0x4, fixed_abs, tag = 'smem constant byte address 0x4 - core index']
  #allocation1 [shape = 'u32[144,128]{1,0:T(1,128)}', space=vmem, size = 0x12000, scoped, tag = 'internal scratch']
  %s0 = inlined_call_operand.hbm [shape: bf16[16,16], index: 0, kind: input, shape index: {}]
  %s1 = inlined_call_operand.hbm [shape: bf16[16,256], index: 1, kind: input, shape index: {}]
  %s2 = inlined_call_operand.vmem [shape: f32[1,256], index: 2, kind: input, shape index: {}]
  %s3 = inlined_call_operand.hbm [shape: bf16[16,128], index: 3, kind: output, shape index: {0}]
  %s4 = inlined_call_operand.hbm [shape: bf16[16,128], index: 4, kind: output, shape index: {1}]
  %5 = xla_tuple %s3, %s4
  %s6 = sld [smem:[#allocation0]]
  $region38: #{tpu_custom_call.1} parent=0
    _
  %s8 = ssub.s32 1, %s6
  %s9 = scalar_select 0, %s8, %s6
  $region1: #{tpu_custom_call.1} parent=0
    #allocation2 [shape = 'u8[4096]{0}', space=vmem, size = 0x1000, scoped, tag = 'input window, operand 0, single buffered']
    #allocation3 [shape = 's32[1]{0}', space=sflag, size = 0x4, scoped, tag = 'scoped memory for tpu_custom_call.1']
    #allocation4 [shape = 's32[1]{0}', space=sflag, size = 0x4, scoped, tag = 'scoped memory for tpu_custom_call.1']
    #allocation5 [shape = 'u8[8192]{0}', space=vmem, size = 0x2000, scoped, tag = 'input window, operand 1, single buffered']
    #allocation6 [shape = 's32[1]{0}', space=sflag, size = 0x4, scoped, tag = 'scoped memory for tpu_custom_call.1']
    #allocation7 [shape = 'u8[4096]{0}', space=vmem, size = 0x1000, scoped, tag = 'output window, operand 0, single buffered']
    #allocation8 [shape = 'u8[4096]{0}', space=vmem, size = 0x1000, scoped, tag = 'output window, operand 1, single buffered']
    #allocation9 [shape = 's32[1]{0}', space=sflag, size = 0x4, scoped, tag = 'scoped memory for tpu_custom_call.1']
    %10 = vsyncpa [#allocation3], 0
    %11 = vsyncpa [#allocation6], 0
    %12 = vsyncpa [#allocation4], 0
    %13 = vsyncpa [#allocation9], 0
    // Predicated region
    $region2: #{tpu_custom_call.1} parent=1 // pred_check
      _
    $region3: #{tpu_custom_call.1} parent=1 // pred_check_branch
      %15 = sbr.rel (0) target = $region5
    $region4: #{tpu_custom_call.1} parent=1 // pred_region
      %s17 = ssub.s32 128, 128
      %18 = vsyncadd [#allocation3], %s17
      %s19 = sshll.u32 [#allocation2], 4
      %s20 = int_to_ptr.vmem [resolvable:$true] %s19
      %25 = dma.hbm_to_vmem [thread:$0]  %s0, 128, %s20, [#allocation3], 64, 64, 4
    $region5: #{tpu_custom_call.1} parent=1 // pred_fallthru
      _
    // Predicated region
    $region6: #{tpu_custom_call.1} parent=1 // pred_check
      _
    $region7: #{tpu_custom_call.1} parent=1 // pred_check_branch
      %27 = sbr.rel (0) target = $region9
    $region8: #{tpu_custom_call.1} parent=1 // pred_region
      %s29 = ssub.s32 256, 256
      %30 = vsyncadd [#allocation6], %s29
      %s31 = sshll.u32 [#allocation5], 4
      %s32 = int_to_ptr.vmem [resolvable:$true] %s31
      %37 = dma.hbm_to_vmem [thread:$0]  %s1, 256, %s32, [#allocation6], 128, 128, 8
    $region9: #{tpu_custom_call.1} parent=1 // pred_fallthru
      _
    // Predicated region
    $region10: #{tpu_custom_call.1} parent=1 // pred_check
      _
    $region11: #{tpu_custom_call.1} parent=1 // pred_check_branch
      %39 = sbr.rel (0) target = $region13
    $region12: #{tpu_custom_call.1} parent=1 // pred_region
      _
    $region13: #{tpu_custom_call.1} parent=1 // pred_fallthru
      _
    // Predicated region
    $region14: #{tpu_custom_call.1} parent=1 // pred_check
      _
    $region15: #{tpu_custom_call.1} parent=1 // pred_check_branch
      %41 = sbr.rel (0) target = $region17
    $region16: #{tpu_custom_call.1} parent=1 // pred_region
      %42 = dma.done [#allocation3], 128
    $region17: #{tpu_custom_call.1} parent=1 // pred_fallthru
      _
    // Predicated region
    $region18: #{tpu_custom_call.1} parent=1 // pred_check
      _
    $region19: #{tpu_custom_call.1} parent=1 // pred_check_branch
      %44 = sbr.rel (0) target = $region21
    $region20: #{tpu_custom_call.1} parent=1 // pred_region
      %45 = dma.done [#allocation6], 256
    $region21: #{tpu_custom_call.1} parent=1 // pred_fallthru
      _
    %v47 = vld [vmem:[#allocation2] sm:$0xf]
    %v48 = vld [vmem:[#allocation2 + $0x4] sm:$0xf]
    %v49 = vld [vmem:[#allocation5] sm:$0xff]
    %v50 = vld [vmem:[#allocation5 + $0x8] sm:$0xff]
    %v51 = vld [vmem:[%s2] sm:$0x3]
    %v53 = vlaneseq
    %v54 = vshrl.u32 %v53, 7
    %v55 = vsub.s32 0, %v54
    %v56 = vrot.slane %v51, %v55
    %v57 = vlaneseq
    %v58 = vshrl.u32 %v57, 7
    %v59 = vsub.s32 1, %v58
    %v60 = vrot.slane %v51, %v59
    %v65 = vunpack.c.l.b16 %v47
    %v66 = vunpack.c.l.b16 %v48
    %v67 = vpack.c.b16 %v66, %v65
    %v70 = vunpack.c.l.b16 %v49
    %v71 = vunpack.c.h.b16 %v49
    %v72 = vunpack.c.l.b16 %v50
    %v73 = vunpack.c.h.b16 %v50
    %v74 = vpack.c.b16 %v72, %v70
    %v75 = vpack.c.b16 %v73, %v71
    %vm78 = vcmask 130048
    %v80 = vsel %vm78, %v67, 0
    %82 = vmatprep.subr.bf16.mxu0 %v75
    %83 = vmatpush1.bf16.msra.mxu0 %v74
    %84 = vmatprep.subr.bf16.mxu0 0
    %85 = vmatpush1.bf16.msra.mxu0 0
    %86 = vmatprep.subr.bf16.mxu0 0
    %87 = vmatpush1.bf16.msra.mxu0 0
    %88 = vmatprep.subr.bf16.mxu0 0
    %89 = vmatpush1.bf16.msra.mxu0 0
    %90 = vmatprep.subr.bf16.mxu0 0
    %91 = vmatpush1.bf16.msra.mxu0 0
    %92 = vmatprep.subr.bf16.mxu0 0
    %93 = vmatpush1.bf16.msra.mxu0 0
    %94 = vmatprep.subr.bf16.mxu0 0
    %95 = vmatpush1.bf16.msra.mxu0 0
    %96 = vmatprep.subr.bf16.mxu0 0
    %97 = vmatpush1.bf16.msra.mxu0 0
    %98 = vmatprep.subr.bf16.mxu0 0
    %99 = vmatpush1.bf16.msra.mxu0 0
    %100 = vmatprep.subr.bf16.mxu0 0
    %101 = vmatpush1.bf16.msra.mxu0 0
    %102 = vmatprep.subr.bf16.mxu0 0
    %103 = vmatpush1.bf16.msra.mxu0 0
    %104 = vmatprep.subr.bf16.mxu0 0
    %105 = vmatpush1.bf16.msra.mxu0 0
    %106 = vmatprep.subr.bf16.mxu0 0
    %107 = vmatpush1.bf16.msra.mxu0 0
    %108 = vmatprep.subr.bf16.mxu0 0
    %109 = vmatpush1.bf16.msra.mxu0 0
    %110 = vmatprep.subr.bf16.mxu0 0
    %111 = vmatpush1.bf16.msra.mxu0 0
    %112 = vmatprep.subr.bf16.mxu0 0
    %113 = vmatpush1.bf16.msra.mxu0 0
    %114 = vmatprep.mubr.bf16.mxu0 0
    %115 = vmatmul.mubr.bf16.gmra.mrb[0].mxu0 %v80
    %v116 = vpop.f32.mrb[0].mxu0
    %v117 = vadd.f32 %v56, %v116
    %v118 = vpop.f32.mrb[0].mxu0
    %v119 = vadd.f32 %v60, %v118
    %v120 = vpop.f32.mrb[0].mxu0
    %v121 = vadd.f32 %v56, %v120
    %v122 = vpop.f32.mrb[0].mxu0
    %v123 = vadd.f32 %v60, %v122
    %124 = vdwg.mxu0
    %v125 = vpack.c.bf16 %v121, %v117
    %v127 = vunpack.c.l.b16 %v125
    %v128 = vunpack.c.h.b16 %v125
    %v129 = vpack.c.b16 %v127, %v127
    %v130 = vpack.c.b16 %v128, %v128
    %133 = vst [vmem:[#allocation7] sm:$0xf] %v129
    %134 = vst [vmem:[#allocation7 + $0x4] sm:$0xf] %v130
    %v135 = vpack.c.bf16 %v123, %v119
    %v137 = vunpack.c.l.b16 %v135
    %v138 = vunpack.c.h.b16 %v135
    %v139 = vpack.c.b16 %v137, %v137
    %v140 = vpack.c.b16 %v138, %v138
    %143 = vst [vmem:[#allocation8] sm:$0xf] %v139
    %144 = vst [vmem:[#allocation8 + $0x4] sm:$0xf] %v140
    // Predicated region
    $region22: #{tpu_custom_call.1} parent=1 // pred_check
      _
    $region23: #{tpu_custom_call.1} parent=1 // pred_check_branch
      %146 = sbr.rel (0) target = $region25
    $region24: #{tpu_custom_call.1} parent=1 // pred_region
      %s148 = ssub.s32 128, 128
      %149 = vsyncadd [#allocation4], %s148
      %s150 = sshll.u32 [#allocation7], 4
      %s151 = int_to_ptr.vmem [resolvable:$true] %s150
      %156 = dma.vmem_to_hbm [thread:$0]  %s151, 128, %s3, [#allocation4], 64, 64, 4
    $region25: #{tpu_custom_call.1} parent=1 // pred_fallthru
      _
    // Predicated region
    $region26: #{tpu_custom_call.1} parent=1 // pred_check
      _
    $region27: #{tpu_custom_call.1} parent=1 // pred_check_branch
      %158 = sbr.rel (0) target = $region29
    $region28: #{tpu_custom_call.1} parent=1 // pred_region
      %s160 = ssub.s32 128, 128
      %161 = vsyncadd [#allocation9], %s160
      %s162 = sshll.u32 [#allocation8], 4
      %s163 = int_to_ptr.vmem [resolvable:$true] %s162
      %168 = dma.vmem_to_hbm [thread:$0]  %s163, 128, %s4, [#allocation9], 64, 64, 4
    $region29: #{tpu_custom_call.1} parent=1 // pred_fallthru
      _
    // Predicated region
    $region30: #{tpu_custom_call.1} parent=1 // pred_check
      _
    $region31: #{tpu_custom_call.1} parent=1 // pred_check_branch
      %170 = sbr.rel (0) target = $region33
    $region32: #{tpu_custom_call.1} parent=1 // pred_region
      %171 = dma.done [#allocation4], 128
    $region33: #{tpu_custom_call.1} parent=1 // pred_fallthru
      _
    // Predicated region
    $region34: #{tpu_custom_call.1} parent=1 // pred_check
      _
    $region35: #{tpu_custom_call.1} parent=1 // pred_check_branch
      %173 = sbr.rel (0) target = $region37
    $region36: #{tpu_custom_call.1} parent=1 // pred_region
      %174 = dma.done [#allocation9], 128
    $region37: #{tpu_custom_call.1} parent=1 // pred_fallthru
      _
    %175 = vsyncpa [#allocation3], 1
    %176 = vsyncpa [#allocation6], 1
    %177 = vsyncpa [#allocation4], 1
    %178 = vsyncpa [#allocation9], 1

</llo_original>
